<compile_context>
chip_gen: v7x
topology: tpu7x:2x2x1
jax: 0.10.0
libtpu: 0.0.40
codegen_flags: <defaults>
</compile_context>

<pallas_src>
import functools

import jax
import jax.numpy as jnp
import numpy as np
from jax.experimental import pallas as pl
from jax.experimental.pallas import tpu as pltpu


_TARGET_BLOCK_BYTES = 2 * 1024 * 1024   # ~2 MiB x-block: at the DMA-amortization knee, v7x-safe
_MAX_BLOCK_ROWS = 256                   # cap on sublane rows per block


def _make_positional_encoding(embed: int, pad_size: int) -> np.ndarray:
    """Deterministic sinusoidal PE, same formula as the PyTorch module."""
    pos = np.arange(pad_size, dtype=np.float64)[:, None]            # (P, 1)
    i = np.arange(embed, dtype=np.float64)[None, :]                 # (1, E)
    angle = pos / np.power(10000.0, (np.floor(i / 2.0) * 2.0) / embed)
    pe = np.where((np.arange(embed) % 2) == 0, np.sin(angle), np.cos(angle))
    return pe.astype(np.float32)                                    # (P, E)


def _sublane_multiple(dtype) -> int:
    """Rows per VMEM sublane tile for this dtype: 8 (4B), 16 (2B), 32 (1B)."""
    return 8 * max(1, 4 // np.dtype(dtype).itemsize)


def _padded_block_bytes(rows: int, cols: int, dtype) -> int:
    """VMEM bytes one (rows, cols) block really occupies (sublane/lane padded)."""
    sl = _sublane_multiple(dtype)
    pr = -(-rows // sl) * sl
    pc = -(-cols // 128) * 128
    return pr * pc * np.dtype(dtype).itemsize


def _row_tile(total_rows: int, align: int, cap: int) -> int:
    """Full extent if small; otherwise a multiple of `align` (ragged tail via cdiv)."""
    if total_rows <= cap:
        return total_rows
    return max((cap // align) * align, align)


def _col_tile(total_cols: int, padded_rows: int, itemsize: int, target_bytes: int) -> int:
    """Full extent if it fits the budget; otherwise a 128-multiple (ragged tail via cdiv)."""
    max_cols = max(128, (target_bytes // max(1, padded_rows * itemsize)) // 128 * 128)
    if total_cols <= max_cols:
        return total_cols
    return max_cols


def _pe_add_kernel(x_ref, pe_ref, o_ref):
    # Rank-matched broadcast add on the VPU (sublane / leading-dim broadcast of pe).
    o_ref[...] = x_ref[...] + pe_ref[...]


def _pe_add_dropout_kernel(x_ref, pe_ref, keep_ref, o_ref, *, scale: float):
    y = (x_ref[...] + pe_ref[...]) * scale           # inverted-dropout scaling
    o_ref[...] = jnp.where(keep_ref[...] != 0, y, jnp.zeros_like(y))


def positional_encoding_forward(x, pe, *, dropout_p: float = 0.1,
                                train: bool = False, rng_key=None):
    """x: (B, P, E); pe: (P, E). Returns dropout(x + pe) with PyTorch semantics."""
    B, P, E = x.shape
    assert pe.shape == (P, E)
    dtype = x.dtype
    itemsize = np.dtype(dtype).itemsize
    pe = pe.astype(dtype)   # pre-cast so the in-kernel add never promotes

    use_dropout = bool(train) and float(dropout_p) > 0.0
    if use_dropout:
        if rng_key is None:
            raise ValueError("train=True with dropout_p > 0 requires an explicit rng_key")
        # uint8 keep-mask: 1 B/elem streamed into the kernel (vs 4 B/elem for f32 uniform).
        keep = (jax.random.uniform(rng_key, (B, P, E), dtype=jnp.float32)
                >= float(dropout_p)).astype(jnp.uint8)
        kernel = functools.partial(_pe_add_dropout_kernel,
                                   scale=1.0 / (1.0 - float(dropout_p)))
    else:
        keep = None
        kernel = _pe_add_kernel

    # Row alignment: dtype sublane tile; keep uint8 mask tiles whole when present.
    row_align = _sublane_multiple(dtype)
    if use_dropout:
        row_align = max(row_align, _sublane_multiple(jnp.uint8))

    if E % 128 == 0:
        # Lane-aligned 3-D path: good sublane utilization even when B < 8.
        TP = _row_tile(P, row_align, _MAX_BLOCK_ROWS)
        padded_tp = -(-TP // row_align) * row_align
        TE = _col_tile(E, padded_tp, itemsize, _TARGET_BLOCK_BYTES)
        grid = (pl.cdiv(E, TE), pl.cdiv(P, TP), B)          # batch innermost: pe stays resident
        x_spec = pl.BlockSpec((1, TP, TE), lambda e, p, b: (b, p, e))
        pe_spec = pl.BlockSpec((TP, TE), lambda e, p, b: (p, e))
        out_spec = pl.BlockSpec((1, TP, TE), lambda e, p, b: (b, p, e))
        mask_spec = pl.BlockSpec((1, TP, TE), lambda e, p, b: (b, p, e))
        x_in, pe_in, keep_in = x, pe, keep
        out_shape = jax.ShapeDtypeStruct((B, P, E), dtype)
        semantics = ("parallel", "parallel", "parallel")
        blk_rows, blk_cols, pe_rows = TP, TE, TP
    else:
        # Lane-dense 2-D slab path (covers E not a multiple of 128, e.g. E=32).
        M = P * E
        x_in = x.reshape(B, M)
        pe_in = pe.reshape(1, M)
        keep_in = keep.reshape(B, M) if keep is not None else None
        TB = _row_tile(B, row_align, _MAX_BLOCK_ROWS)
        padded_tb = -(-TB // row_align) * row_align
        TC = _col_tile(M, padded_tb, itemsize, _TARGET_BLOCK_BYTES)
        grid = (pl.cdiv(M, TC), pl.cdiv(B, TB))             # cols outer, rows inner: pe resident
        x_spec = pl.BlockSpec((TB, TC), lambda c, r: (r, c))
        pe_spec = pl.BlockSpec((1, TC), lambda c, r: (0, c))
        out_spec = pl.BlockSpec((TB, TC), lambda c, r: (r, c))
        mask_spec = pl.BlockSpec((TB, TC), lambda c, r: (r, c))
        out_shape = jax.ShapeDtypeStruct((B, M), dtype)
        semantics = ("parallel", "parallel")
        blk_rows, blk_cols, pe_rows = TB, TC, 1

    # VMEM budget from the real (padded, double-buffered) per-step footprint.
    need = 2 * (2 * _padded_block_bytes(blk_rows, blk_cols, dtype)      # x + out
                + _padded_block_bytes(pe_rows, blk_cols, dtype))        # pe
    if use_dropout:
        need += 2 * _padded_block_bytes(blk_rows, blk_cols, jnp.uint8)  # keep mask
    vmem_limit = int(min(max(need + (2 << 20), 16 << 20), 64 << 20))

    in_specs = [x_spec, pe_spec] + ([mask_spec] if use_dropout else [])
    args = (x_in, pe_in) + ((keep_in,) if use_dropout else ())

    out = pl.pallas_call(
        kernel,
        out_shape=out_shape,
        grid=grid,
        in_specs=in_specs,
        out_specs=out_spec,
        compiler_params=pltpu.CompilerParams(
            dimension_semantics=semantics,
            vmem_limit_bytes=vmem_limit,
        ),
    )(*args)
    return out.reshape(B, P, E)


if __name__ == "__main__":
    # Small shapes consistent with the module: batch=2, pad_size=8, embed=32.
    B, PAD, EMBED = 2, 8, 32
    DROPOUT = 0.1

    key = jax.random.PRNGKey(0)
    kx, kd, kx2 = jax.random.split(key, 3)

    x = jax.random.normal(kx, (B, PAD, EMBED), dtype=jnp.float32)
    pe = jnp.asarray(_make_positional_encoding(EMBED, PAD))

    # Eval-mode forward (dropout is identity), exercises the 2-D slab path.
    out = jax.block_until_ready(
        positional_encoding_forward(x, pe, dropout_p=DROPOUT, train=False))
    ref = x + pe[None, :, :]
    assert out.shape == (B, PAD, EMBED)
    assert jnp.allclose(out, ref, atol=1e-6), "mismatch vs reference (eval)"

    # Training-mode dropout: nonzero outputs must be scaled copies of ref.
    out_train = jax.block_until_ready(
        positional_encoding_forward(x, pe, dropout_p=DROPOUT, train=True, rng_key=kd))
    nz = out_train != 0
    assert jnp.allclose(jnp.where(nz, out_train, 0.0),
                        jnp.where(nz, ref / (1.0 - DROPOUT), 0.0),
                        atol=1e-5), "mismatch vs reference (train)"

    # Also exercise the lane-aligned 3-D path (E a multiple of 128).
    E2 = 128
    x2 = jax.random.normal(kx2, (B, PAD, E2), dtype=jnp.float32)
    pe2 = jnp.asarray(_make_positional_encoding(E2, PAD))
    out2 = jax.block_until_ready(
        positional_encoding_forward(x2, pe2, dropout_p=DROPOUT, train=False))
    assert jnp.allclose(out2, x2 + pe2[None, :, :], atol=1e-6), "mismatch (3-D path)"

    print("KERNEL_OK")
</pallas_src>

<mosaic_0001>
module attributes {stable_mosaic.version = 11 : i64} {
  func.func @_pe_add_kernel(%arg0: i32, %arg1: i32, %arg2: memref<2x256xf32, #tpu.memory_space<vmem>>, %arg3: memref<1x256xf32, #tpu.memory_space<vmem>>, %arg4: memref<2x256xf32, #tpu.memory_space<vmem>>) attributes {dimension_semantics = [#tpu.dimension_semantics<parallel>, #tpu.dimension_semantics<parallel>], iteration_bounds = array<i64: 1, 1>, scalar_prefetch = 0 : i64, scratch_operands = 0 : i64, tpu.core_type = #tpu.core_type<tc>, window_params = [{transform_indices = @transform_0, window_bounds = array<i64: 2, 256>}, {transform_indices = @transform_1, window_bounds = array<i64: 1, 256>}, {transform_indices = @transform_2, window_bounds = array<i64: 2, 256>}]} {
    %c0 = arith.constant 0 : index
    %c0_0 = arith.constant 0 : index
    %0 = vector.load %arg2[%c0, %c0_0] : memref<2x256xf32, #tpu.memory_space<vmem>>, vector<2x256xf32>
    %c0_1 = arith.constant 0 : index
    %c0_2 = arith.constant 0 : index
    %1 = vector.load %arg3[%c0_1, %c0_2] : memref<1x256xf32, #tpu.memory_space<vmem>>, vector<1x256xf32>
    %2 = vector.broadcast %1 : vector<1x256xf32> to vector<2x256xf32>
    %3 = arith.addf %0, %2 : vector<2x256xf32>
    %c0_3 = arith.constant 0 : index
    %c0_4 = arith.constant 0 : index
    %4 = vector.load %arg4[%c0_3, %c0_4] : memref<2x256xf32, #tpu.memory_space<vmem>>, vector<2x256xf32>
    tpu.vector_store %arg4[%c0_3, %c0_4], %3 {strides = array<i32>} : memref<2x256xf32, #tpu.memory_space<vmem>>, vector<2x256xf32>,
    return
  }
  func.func @transform_0(%arg0: i32, %arg1: i32) -> (i32, i32) {
    %c0_i32 = arith.constant 0 : i32
    return %arg1, %arg0 : i32, i32
  }
  func.func @transform_1(%arg0: i32, %arg1: i32) -> (i32, i32) {
    %c0_i32 = arith.constant 0 : i32
    %c0_i32_0 = arith.constant 0 : i32
    return %c0_i32, %arg0 : i32, i32
  }
  func.func @transform_2(%arg0: i32, %arg1: i32) -> (i32, i32) {
    %c0_i32 = arith.constant 0 : i32
    return %arg1, %arg0 : i32, i32
  }
}

</mosaic_0001>

<llo_original>
// kernel: tpu_custom_call.1
$region0: #{tpu_custom_call.1}
  #allocation0 [shape = 'u32[]', space=smem, size = 0x4, offset = 0x4, fixed_abs, tag = 'smem constant byte address 0x4 - core index']
  #allocation1 [shape = 'u32[144,128]{1,0:T(1,128)}', space=vmem, size = 0x12000, scoped, tag = 'internal scratch']
  %s0 = inlined_call_operand.hbm [shape: f32[2,256], index: 0, kind: input, shape index: {}]
  %s1 = inlined_call_operand.vmem [shape: f32[1,256], index: 1, kind: input, shape index: {}]
  %s2 = inlined_call_operand.hbm [shape: f32[2,256], index: 2, kind: output, shape index: {}]
  %s3 = sld [smem:[#allocation0]]
  $region22: #{tpu_custom_call.1} parent=0
    _
  %s5 = ssub.s32 1, %s3
  %s6 = scalar_select 0, %s5, %s3
  $region1: #{tpu_custom_call.1} parent=0
    #allocation2 [shape = 'u8[2048]{0}', space=vmem, size = 0x800, scoped, tag = 'input window, operand 0, single buffered']
    #allocation3 [shape = 's32[1]{0}', space=sflag, size = 0x4, scoped, tag = 'scoped memory for tpu_custom_call.1']
    #allocation4 [shape = 's32[1]{0}', space=sflag, size = 0x4, scoped, tag = 'scoped memory for tpu_custom_call.1']
    #allocation5 [shape = 'u8[2048]{0}', space=vmem, size = 0x800, scoped, tag = 'output window, operand 0, single buffered']
    %7 = vsyncpa [#allocation3], 0
    %8 = vsyncpa [#allocation4], 0
    // Predicated region
    $region2: #{tpu_custom_call.1} parent=1 // pred_check
      _
    $region3: #{tpu_custom_call.1} parent=1 // pred_check_branch
      %10 = sbr.rel (0) target = $region5
    $region4: #{tpu_custom_call.1} parent=1 // pred_region
      %s12 = ssub.s32 64, 64
      %13 = vsyncadd [#allocation3], %s12
      %s15 = sshll.u32 [#allocation2], 4
      %s16 = int_to_ptr.vmem [resolvable:$true] %s15
      %18 = dma.hbm_to_vmem [thread:$0]  %s0, 64, %s16, [#allocation3]
    $region5: #{tpu_custom_call.1} parent=1 // pred_fallthru
      _
    // Predicated region
    $region6: #{tpu_custom_call.1} parent=1 // pred_check
      _
    $region7: #{tpu_custom_call.1} parent=1 // pred_check_branch
      %20 = sbr.rel (0) target = $region9
    $region8: #{tpu_custom_call.1} parent=1 // pred_region
      _
    $region9: #{tpu_custom_call.1} parent=1 // pred_fallthru
      _
    // Predicated region
    $region10: #{tpu_custom_call.1} parent=1 // pred_check
      _
    $region11: #{tpu_custom_call.1} parent=1 // pred_check_branch
      %22 = sbr.rel (0) target = $region13
    $region12: #{tpu_custom_call.1} parent=1 // pred_region
      %23 = dma.done [#allocation3], 64
    $region13: #{tpu_custom_call.1} parent=1 // pred_fallthru
      _
    %v24 = vld [vmem:[#allocation2] sm:$0xf]
    %v25 = vld [vmem:[%s1] sm:$0x3]
    %v27 = vlaneseq
    %v28 = vshrl.u32 %v27, 7
    %v29 = vsub.s32 0, %v28
    %v30 = vrot.slane %v25, %v29
    %v31 = vlaneseq
    %v32 = vshrl.u32 %v31, 7
    %v33 = vsub.s32 1, %v32
    %v34 = vrot.slane %v25, %v33
    %v35 = vcombine.low %v30, %v34
    %v37 = vunpack.c.l.s4 1983009808
    %v38 = vunpack.c.0.s8 %v37
    %v39 = vlaneseq
    %v40 = vshrl.u32 %v39, 7
    %v41 = vsub.s32 %v38, %v40
    %v42 = vrot.slane %v35, %v41
    %v44 = vadd.f32 %v24, %v42
    %45 = vst [vmem:[#allocation5] sm:$0xf] %v44
    // Predicated region
    $region14: #{tpu_custom_call.1} parent=1 // pred_check
      _
    $region15: #{tpu_custom_call.1} parent=1 // pred_check_branch
      %47 = sbr.rel (0) target = $region17
    $region16: #{tpu_custom_call.1} parent=1 // pred_region
      %s49 = ssub.s32 64, 64
      %50 = vsyncadd [#allocation4], %s49
      %s52 = sshll.u32 [#allocation5], 4
      %s53 = int_to_ptr.vmem [resolvable:$true] %s52
      %55 = dma.vmem_to_hbm [thread:$0]  %s53, 64, %s2, [#allocation4]
    $region17: #{tpu_custom_call.1} parent=1 // pred_fallthru
      _
    // Predicated region
    $region18: #{tpu_custom_call.1} parent=1 // pred_check
      _
    $region19: #{tpu_custom_call.1} parent=1 // pred_check_branch
      %57 = sbr.rel (0) target = $region21
    $region20: #{tpu_custom_call.1} parent=1 // pred_region
      %58 = dma.done [#allocation4], 64
    $region21: #{tpu_custom_call.1} parent=1 // pred_fallthru
      _
    %59 = vsyncpa [#allocation3], 1
    %60 = vsyncpa [#allocation4], 1

</llo_original>
